<compile_context>
chip_gen: v6e
topology: v6e:2x2x1
jax: 0.10.0
libtpu: 0.0.40
codegen_flags: <defaults>
</compile_context>

<pallas_src>
import jax
import jax.numpy as jnp
from jax.experimental import pallas as pl
from jax.experimental.pallas import tpu as pltpu


def u_dot_v_kernel(u_ref, v_ref, o_ref):
    # u_ref, v_ref: (D, tm) tiles of gathered src/dst features
    #               (hidden dim on sublanes, edges on lanes).
    # o_ref:        (1, 1, tm) lane-dense per-edge dot-product scores (f32).
    prod = u_ref[...].astype(jnp.float32) * v_ref[...].astype(jnp.float32)
    s = jnp.sum(prod, axis=0, keepdims=True)          # (1, tm) cross-sublane reduce
    o_ref[...] = s.reshape(o_ref.shape)


def _vmem_budget_bytes():
    """Generation-aware VMEM budget: ~28 MiB on 64 MiB-VMEM chips (v7x-class),
    ~56 MiB on 128 MiB-VMEM chips (v5e/v6e)."""
    cap = None
    try:
        cap = getattr(pltpu.get_tpu_info(), "vmem_capacity_bytes", None)
    except Exception:
        cap = None
    if cap is None:
        cap = 64 * 1024 * 1024            # unknown -> assume the smallest (v7x per-TC)
    if cap <= 64 * 1024 * 1024:
        return 28 * 1024 * 1024
    return 56 * 1024 * 1024


def _per_edge_vmem_bytes(D, itemsize):
    """Per-edge VMEM footprint of one tile, counting everything the review
    flagged: double-buffered inputs + ~3 full-tile f32 in-kernel temporaries
    (bf16 upcasts + product) + double-buffered f32 output row."""
    return 4 * D * itemsize + 3 * D * 4 + 2 * 4


def _pick_edge_tile(E, D, itemsize, vmem_budget, tm_max=32768):
    """Largest multiple-of-128 edge tile whose full footprint fits the budget,
    clamped for tiny edge sets and to keep >=2 tiles for v7x megacore."""
    per_edge = _per_edge_vmem_bytes(D, itemsize)
    tm_budget = max(128, (vmem_budget // per_edge) // 128 * 128)
    e_ceil = ((E + 127) // 128) * 128
    tm = min(tm_max, tm_budget, max(128, e_ceil))
    if e_ceil >= 256:
        # Keep at least 2 edge tiles so the "parallel" axis can shard across
        # v7x's two TensorCores (no effect on single-TC v5e/v6e).
        tm = min(tm, max(128, (e_ceil // 2) // 128 * 128))
    return max(128, tm)


def u_dot_v_lane_major(h_u_t, h_v_t, *, tm):
    """Per-edge dot product on lane-major inputs.

    h_u_t, h_v_t: (D, E_pad) gathered endpoint features, E_pad % tm == 0.
    returns:      (num_tiles, 1, tm) float32 scores; flatten row-major to get
                  scores in edge order.
    """
    D, E_pad = h_u_t.shape
    assert E_pad % tm == 0 and tm % 128 == 0
    num_tiles = E_pad // tm
    itemsize = jnp.dtype(h_u_t.dtype).itemsize

    # VMEM limit from the actual per-tile footprint (inputs + f32 temporaries
    # + output) plus a little slack for Mosaic internal scratch.
    tile_bytes = tm * _per_edge_vmem_bytes(D, itemsize)
    vmem_limit = int(tile_bytes + 2 * 1024 * 1024)

    cost = pl.CostEstimate(
        flops=2 * D * E_pad,
        transcendentals=0,
        bytes_accessed=2 * D * E_pad * itemsize + E_pad * 4,
    )

    return pl.pallas_call(
        u_dot_v_kernel,
        out_shape=jax.ShapeDtypeStruct((num_tiles, 1, tm), jnp.float32),
        grid=(num_tiles,),
        in_specs=[
            pl.BlockSpec((D, tm), lambda i: (0, i)),
            pl.BlockSpec((D, tm), lambda i: (0, i)),
        ],
        out_specs=pl.BlockSpec((1, 1, tm), lambda i: (i, 0, 0)),
        compiler_params=pltpu.CompilerParams(
            dimension_semantics=("parallel",),
            vmem_limit_bytes=vmem_limit,
        ),
        cost_estimate=cost,
    )(h_u_t, h_v_t)


def user_to_item_scorer_forward(h_playlist, h_track, edge_src, edge_dst):
    """Equivalent of UsertoItemScorer.forward on the 'contains' edge type.

    h_playlist: [N_playlist, D] playlist node features ('h')
    h_track:    [N_track, D]    track node features ('h')
    edge_src:   [E] int32 playlist indices (edge source)
    edge_dst:   [E] int32 track indices (edge destination)
    returns:    [E, 1] float32 pair scores (same as DGL fn.u_dot_v output)
    """
    E = edge_src.shape[0]
    if E == 0:
        return jnp.zeros((0, 1), jnp.float32)

    D = h_playlist.shape[1]
    itemsize = jnp.dtype(h_playlist.dtype).itemsize

    tm = _pick_edge_tile(E, D, itemsize, _vmem_budget_bytes())
    num_tiles = pl.cdiv(E, tm)
    e_pad = num_tiles * tm

    # Glue (XLA): pad edge ids to a multiple of the tile (index 0 is a valid
    # node row; padded scores are discarded), gather endpoint rows along the
    # major axis (fast XLA gather path), then transpose the gathered slab to
    # the lane-major (D, E_pad) layout the kernel consumes.
    src = jnp.pad(edge_src, (0, e_pad - E))
    dst = jnp.pad(edge_dst, (0, e_pad - E))
    h_u_t = jnp.take(h_playlist, src, axis=0).T    # (D, E_pad)
    h_v_t = jnp.take(h_track, dst, axis=0).T       # (D, E_pad)

    tile_scores = u_dot_v_lane_major(h_u_t, h_v_t, tm=tm)   # (num_tiles, 1, tm)
    return tile_scores.reshape(e_pad, 1)[:E]


def _check_case(key, n_playlist, n_track, d, e):
    k1, k2, k3, k4 = jax.random.split(key, 4)
    h_playlist = jax.random.normal(k1, (n_playlist, d), dtype=jnp.float32)
    h_track = jax.random.normal(k2, (n_track, d), dtype=jnp.float32)
    edge_src = jax.random.randint(k3, (e,), 0, n_playlist, dtype=jnp.int32)
    edge_dst = jax.random.randint(k4, (e,), 0, n_track, dtype=jnp.int32)

    scores = jax.jit(user_to_item_scorer_forward)(
        h_playlist, h_track, edge_src, edge_dst)
    scores = jax.block_until_ready(scores)

    ref = jnp.sum(h_playlist[edge_src] * h_track[edge_dst], axis=-1, keepdims=True)
    assert scores.shape == (e, 1)
    assert jnp.allclose(scores, ref, atol=1e-5, rtol=1e-5)


if __name__ == "__main__":
    key = jax.random.PRNGKey(0)
    key_a, key_b = jax.random.split(key)

    # Primary case (small shapes consistent with the module's forward).
    _check_case(key_a, n_playlist=4, n_track=16, d=32, e=16)
    # Multi-tile case (exercises >1 grid step and the >=2-tiles clamp).
    _check_case(key_b, n_playlist=8, n_track=64, d=32, e=300)

    print("KERNEL_OK")
</pallas_src>

<mosaic_0001>
module attributes {stable_mosaic.version = 11 : i64} {
  func.func @u_dot_v_kernel(%arg0: i32, %arg1: memref<32x128xf32, #tpu.memory_space<vmem>>, %arg2: memref<32x128xf32, #tpu.memory_space<vmem>>, %arg3: memref<1x1x128xf32, #tpu.memory_space<vmem>>) attributes {dimension_semantics = [#tpu.dimension_semantics<parallel>], iteration_bounds = array<i64: 1>, scalar_prefetch = 0 : i64, scratch_operands = 0 : i64, tpu.core_type = #tpu.core_type<tc>, window_params = [{transform_indices = @transform_0, window_bounds = array<i64: 32, 128>}, {transform_indices = @transform_1, window_bounds = array<i64: 32, 128>}, {transform_indices = @transform_2, window_bounds = array<i64: 1, 1, 128>}]} {
    %c0 = arith.constant 0 : index
    %c0_0 = arith.constant 0 : index
    %0 = vector.load %arg1[%c0, %c0_0] : memref<32x128xf32, #tpu.memory_space<vmem>>, vector<32x128xf32>
    %c0_1 = arith.constant 0 : index
    %c0_2 = arith.constant 0 : index
    %1 = vector.load %arg2[%c0_1, %c0_2] : memref<32x128xf32, #tpu.memory_space<vmem>>, vector<32x128xf32>
    %2 = arith.mulf %0, %1 : vector<32x128xf32>
    %cst = arith.constant dense<0.000000e+00> : vector<128xf32>
    %3 = vector.multi_reduction <add>, %2, %cst [0] : vector<32x128xf32> to vector<128xf32>
    %4 = vector.shape_cast %3 : vector<128xf32> to vector<1x128xf32>
    %5 = vector.shape_cast %4 : vector<1x128xf32> to vector<1x1x128xf32>
    %c0_3 = arith.constant 0 : index
    %c0_4 = arith.constant 0 : index
    %c0_5 = arith.constant 0 : index
    %6 = vector.load %arg3[%c0_3, %c0_4, %c0_5] : memref<1x1x128xf32, #tpu.memory_space<vmem>>, vector<1x1x128xf32>
    tpu.vector_store %arg3[%c0_3, %c0_4, %c0_5], %5 {strides = array<i32>} : memref<1x1x128xf32, #tpu.memory_space<vmem>>, vector<1x1x128xf32>,
    return
  }
  func.func @transform_0(%arg0: i32) -> (i32, i32) {
    %c0_i32 = arith.constant 0 : i32
    %c0_i32_0 = arith.constant 0 : i32
    return %c0_i32, %arg0 : i32, i32
  }
  func.func @transform_1(%arg0: i32) -> (i32, i32) {
    %c0_i32 = arith.constant 0 : i32
    %c0_i32_0 = arith.constant 0 : i32
    return %c0_i32, %arg0 : i32, i32
  }
  func.func @transform_2(%arg0: i32) -> (i32, i32, i32) {
    %c0_i32 = arith.constant 0 : i32
    %c0_i32_0 = arith.constant 0 : i32
    %c0_i32_1 = arith.constant 0 : i32
    return %arg0, %c0_i32, %c0_i32_0 : i32, i32, i32
  }
}

</mosaic_0001>

<llo_original>
// kernel: user_to_item_scorer_forward.1
$region0: #{user_to_item_scorer_forward.1}
  #allocation0 [shape = 'u32[]', space=smem, size = 0x4, offset = 0x4, fixed_abs, tag = 'smem constant byte address 0x4 - core index']
  #allocation1 [shape = 'u32[144,128]{1,0:T(1,128)}', space=vmem, size = 0x12000, scoped, tag = 'internal scratch']
  %s0 = inlined_call_operand.vmem [shape: f32[32,128], index: 0, kind: input, shape index: {}]
  %s1 = inlined_call_operand.vmem [shape: f32[32,128], index: 1, kind: input, shape index: {}]
  %s2 = inlined_call_operand.vmem [shape: f32[1,1,128], index: 2, kind: output, shape index: {}]
  %s3 = sld [smem:[#allocation0]]
  $region18: #{user_to_item_scorer_forward.1} parent=0
    _
  %s5 = ssub.s32 1, %s3
  %s6 = scalar_select 0, %s5, %s3
  // Predicated region
  $region2: #{user_to_item_scorer_forward.1} parent=0 // pred_check
    _
  $region3: #{user_to_item_scorer_forward.1} parent=0 // pred_check_branch
    %8 = sbr.rel (0) target = $region5
  $region4: #{user_to_item_scorer_forward.1} parent=0 // pred_region
    _
  $region5: #{user_to_item_scorer_forward.1} parent=0 // pred_fallthru
    _
  // Predicated region
  $region6: #{user_to_item_scorer_forward.1} parent=0 // pred_check
    _
  $region7: #{user_to_item_scorer_forward.1} parent=0 // pred_check_branch
    %10 = sbr.rel (0) target = $region9
  $region8: #{user_to_item_scorer_forward.1} parent=0 // pred_region
    _
  $region9: #{user_to_item_scorer_forward.1} parent=0 // pred_fallthru
    _
  %v11 = vld [vmem:[%s0] sm:$0xff]
  %v12 = vld [vmem:[%s0 + $0x8] sm:$0xff]
  %v13 = vld [vmem:[%s0 + $0x10] sm:$0xff]
  %v14 = vld [vmem:[%s0 + $0x18] sm:$0xff]
  %v15 = vld [vmem:[%s1] sm:$0xff]
  %v16 = vld [vmem:[%s1 + $0x8] sm:$0xff]
  %v17 = vld [vmem:[%s1 + $0x10] sm:$0xff]
  %v18 = vld [vmem:[%s1 + $0x18] sm:$0xff]
  %v19 = vmul.f32 %v11, %v15
  %v20 = vmul.f32 %v12, %v16
  %v21 = vmul.f32 %v13, %v17
  %v22 = vmul.f32 %v14, %v18
  %v23 = vadd.f32 %v19, %v20
  %v24 = vadd.f32 %v23, %v21
  %v25 = vadd.f32 %v24, %v22
  %v26 = vrot.slane %v25, 4
  %v27 = vadd.f32 %v25, %v26
  %v28 = vrot.slane %v27, 2
  %v29 = vadd.f32 %v27, %v28
  %v30 = vrot.slane %v29, 1
  %v31 = vadd.f32 %v29, %v30
  %32 = vst [vmem:[%s2] sm:$0x1] %v31
  // Predicated region
  $region10: #{user_to_item_scorer_forward.1} parent=0 // pred_check
    _
  $region11: #{user_to_item_scorer_forward.1} parent=0 // pred_check_branch
    %34 = sbr.rel (0) target = $region13
  $region12: #{user_to_item_scorer_forward.1} parent=0 // pred_region
    _
  $region13: #{user_to_item_scorer_forward.1} parent=0 // pred_fallthru
    _
  // Predicated region
  $region14: #{user_to_item_scorer_forward.1} parent=0 // pred_check
    _
  $region15: #{user_to_item_scorer_forward.1} parent=0 // pred_check_branch
    %36 = sbr.rel (0) target = $region17
  $region16: #{user_to_item_scorer_forward.1} parent=0 // pred_region
    _
  $region17: #{user_to_item_scorer_forward.1} parent=0 // pred_fallthru
    _

</llo_original>
